<compile_context>
chip_gen: v6e
topology: v6e:2x2x1
jax: 0.10.0
libtpu: 0.0.40
codegen_flags: <defaults>
</compile_context>

<pallas_src>
import math

import jax
import jax.numpy as jnp
from jax.experimental import pallas as pl
from jax.experimental.pallas import tpu as pltpu

C_IN = 32          # fixed by the module definition
C_OUT = 6          # 1 (score) + 4 (loc) + 1 (angle)


def _kernel(x_ref, wt_ref, p_ref, score_ref, geo_ref):
    # x_ref:     (32, TM)  channels-first pixel tile (compute dtype)
    # wt_ref:    (6, 32)   fused 1x1-conv weights, transposed (resident)
    # p_ref:     (6, 3)    per-row [bias | post-sigmoid scale | post-sigmoid shift], f32
    # score_ref: (1, TM)
    # geo_ref:   (5, TM)   rows 0..3 = loc*scope, row 4 = angle
    p = p_ref[...]
    bias = p[:, 0:1]          # (6, 1) -> lane broadcast
    scale = p[:, 1:2]
    shift = p[:, 2:3]

    # (6,32)@(32,TM): lowers to an MXU vmatmul with f32 accumulation.
    y = jnp.dot(wt_ref[...], x_ref[...],
                preferred_element_type=jnp.float32) + bias     # (6, TM) f32
    out = jax.nn.sigmoid(y) * scale + shift                    # one fused VPU pass

    score_ref[...] = out[0:1, :].astype(score_ref.dtype)
    geo_ref[...] = out[1:6, :].astype(geo_ref.dtype)


def _choose_tile(n, hw, max_tm):
    """Pick a 128-aligned spatial tile TM (no divisor search, no padding)."""
    max_tm = max(128, (int(max_tm) // 128) * 128)
    tm = min(max_tm, pl.cdiv(hw, 128) * 128)        # never larger than needed
    # Ensure >= 2 grid programs when batch == 1 so both v7x TensorCores
    # get work under the "parallel" semantics.
    if n == 1 and tm >= hw and hw >= 256:
        tm = max(128, ((hw // 2) // 128) * 128)
    return tm


def east_output_head(x_nchw, w_fused, b_fused, scope=512.0, max_tm=32768):
    """x_nchw: (N, 32, H, W) float32 or bfloat16. Returns (score, geo) in NCHW.

    w_fused: (32, 6)  columns = [score | loc(4) | angle]
    b_fused: (6,)
    """
    n, c, h, w = x_nchw.shape
    assert c == C_IN
    hw = h * w

    # NCHW -> (N, 32, H*W): contiguous reshape, no data movement.
    x3 = x_nchw.reshape(n, C_IN, hw)

    tm = _choose_tile(n, hw, max_tm)
    grid = (n, pl.cdiv(hw, tm))                      # ragged last block is fine

    compute_dtype = x_nchw.dtype
    out_dtype = x_nchw.dtype
    wt = jnp.asarray(w_fused).T.astype(compute_dtype)            # (6, 32)

    scope = float(scope)
    bias = jnp.asarray(b_fused, jnp.float32).reshape(C_OUT)
    row_scale = jnp.array([1.0, scope, scope, scope, scope, math.pi], jnp.float32)
    row_shift = jnp.array([0.0, 0.0, 0.0, 0.0, 0.0, -0.5 * math.pi], jnp.float32)
    params = jnp.stack([bias, row_scale, row_shift], axis=1)     # (6, 3) f32

    # VMEM budget: double-buffered input + output tiles, plus small resident
    # weights/params and compiler scratch headroom.  Capped below v7x physical.
    per_step = (C_IN * tm * jnp.dtype(compute_dtype).itemsize
                + C_OUT * tm * jnp.dtype(out_dtype).itemsize)
    vmem_limit = int(min(max(2 * per_step + (2 << 20), 16 << 20), 48 << 20))

    score3, geo3 = pl.pallas_call(
        _kernel,
        out_shape=(
            jax.ShapeDtypeStruct((n, 1, hw), out_dtype),
            jax.ShapeDtypeStruct((n, 5, hw), out_dtype),
        ),
        grid_spec=pltpu.PrefetchScalarGridSpec(
            num_scalar_prefetch=0,
            grid=grid,
            in_specs=[
                # batch dim squeezed; kernel sees (32, TM)
                pl.BlockSpec((None, C_IN, tm), lambda b, t: (b, 0, t)),
                pl.BlockSpec((C_OUT, C_IN), lambda b, t: (0, 0)),
                pl.BlockSpec((C_OUT, 3), lambda b, t: (0, 0)),
            ],
            out_specs=[
                pl.BlockSpec((None, 1, tm), lambda b, t: (b, 0, t)),
                pl.BlockSpec((None, 5, tm), lambda b, t: (b, 0, t)),
            ],
        ),
        compiler_params=pltpu.CompilerParams(
            dimension_semantics=("parallel", "parallel"),
            vmem_limit_bytes=vmem_limit),
    )(x3, wt, params)

    score = score3.reshape(n, 1, h, w)   # free reshape
    geo = geo3.reshape(n, 5, h, w)       # free reshape
    return score, geo


def init_params(key):
    """Deterministic kaiming_normal(fan_out, relu) init for the three 1x1 convs.
    fan_out = out_channels * 1 * 1 -> std = sqrt(2 / out_channels). Biases = 0.
    Returns fused weight (32, 6) and fused bias (6,):
      col 0   -> conv1 (score)
      cols1-4 -> conv2 (loc)
      col 5   -> conv3 (angle)
    """
    k1, k2, k3 = jax.random.split(key, 3)
    w1 = jax.random.normal(k1, (C_IN, 1), jnp.float32) * math.sqrt(2.0 / 1.0)
    w2 = jax.random.normal(k2, (C_IN, 4), jnp.float32) * math.sqrt(2.0 / 4.0)
    w3 = jax.random.normal(k3, (C_IN, 1), jnp.float32) * math.sqrt(2.0 / 1.0)
    w_fused = jnp.concatenate([w1, w2, w3], axis=1)        # (32, 6)
    b_fused = jnp.zeros((C_OUT,), jnp.float32)
    return w_fused, b_fused


def _reference(x_nchw, w_fused, b_fused, scope=512.0):
    """Plain-JAX reference (1x1 conv == per-pixel channel matmul), NCHW."""
    y = jnp.einsum('nchw,cf->nfhw', x_nchw.astype(jnp.float32),
                   w_fused.astype(jnp.float32))
    y = y + b_fused.reshape(1, C_OUT, 1, 1)
    s = jax.nn.sigmoid(y)
    score = s[:, 0:1]
    loc = s[:, 1:5] * scope
    angle = (s[:, 5:6] - 0.5) * math.pi
    geo = jnp.concatenate([loc, angle], axis=1)
    return score, geo


if __name__ == "__main__":
    key = jax.random.PRNGKey(0)
    kx, kx2, kp = jax.random.split(key, 3)

    w_fused, b_fused = init_params(kp)

    # Case 1: batch=2, 16x16 spatial (H*W = 256, exact tile).
    x = jax.random.normal(kx, (2, C_IN, 16, 16), jnp.float32)
    score, geo = east_output_head(x, w_fused, b_fused, scope=512.0)
    score = jax.block_until_ready(score)
    geo = jax.block_until_ready(geo)

    ref_score, ref_geo = _reference(x, w_fused, b_fused, scope=512.0)
    assert score.shape == (2, 1, 16, 16)
    assert geo.shape == (2, 5, 16, 16)
    assert jnp.allclose(score, ref_score, atol=1e-4, rtol=1e-4)
    assert jnp.allclose(geo, ref_geo, atol=1e-2, rtol=1e-4)

    # Case 2: batch=1, 12x20 spatial (H*W = 240, exercises the ragged block).
    x2 = jax.random.normal(kx2, (1, C_IN, 12, 20), jnp.float32)
    score2, geo2 = east_output_head(x2, w_fused, b_fused, scope=512.0)
    score2 = jax.block_until_ready(score2)
    geo2 = jax.block_until_ready(geo2)

    ref_score2, ref_geo2 = _reference(x2, w_fused, b_fused, scope=512.0)
    assert score2.shape == (1, 1, 12, 20)
    assert geo2.shape == (1, 5, 12, 20)
    assert jnp.allclose(score2, ref_score2, atol=1e-4, rtol=1e-4)
    assert jnp.allclose(geo2, ref_geo2, atol=1e-2, rtol=1e-4)

    print("KERNEL_OK")
</pallas_src>

<mosaic_0001>
module attributes {stable_mosaic.version = 11 : i64} {
  func.func @_kernel(%arg0: i32, %arg1: i32, %arg2: memref<1x32x256xf32, #tpu.memory_space<vmem>>, %arg3: memref<6x32xf32, #tpu.memory_space<vmem>>, %arg4: memref<6x3xf32, #tpu.memory_space<vmem>>, %arg5: memref<1x1x256xf32, #tpu.memory_space<vmem>>, %arg6: memref<1x5x256xf32, #tpu.memory_space<vmem>>) attributes {dimension_semantics = [#tpu.dimension_semantics<parallel>, #tpu.dimension_semantics<parallel>], iteration_bounds = array<i64: 2, 1>, scalar_prefetch = 0 : i64, scratch_operands = 0 : i64, tpu.core_type = #tpu.core_type<tc>, window_params = [{transform_indices = @transform_0, window_bounds = array<i64: 1, 32, 256>}, {pipeline_mode = #tpu.pipeline_mode<synchronous>, transform_indices = @transform_1, window_bounds = array<i64: 6, 32>}, {pipeline_mode = #tpu.pipeline_mode<synchronous>, transform_indices = @transform_2, window_bounds = array<i64: 6, 3>}, {transform_indices = @transform_3, window_bounds = array<i64: 1, 1, 256>}, {transform_indices = @transform_4, window_bounds = array<i64: 1, 5, 256>}]} {
    %c0 = arith.constant 0 : index
    %c0_0 = arith.constant 0 : index
    %0 = vector.load %arg4[%c0, %c0_0] : memref<6x3xf32, #tpu.memory_space<vmem>>, vector<6x3xf32>
    %1 = vector.extract_strided_slice %0 {offsets = [0, 0], sizes = [6, 1], strides = [1, 1]} : vector<6x3xf32> to vector<6x1xf32>
    %2 = vector.extract_strided_slice %0 {offsets = [0, 1], sizes = [6, 1], strides = [1, 1]} : vector<6x3xf32> to vector<6x1xf32>
    %3 = vector.extract_strided_slice %0 {offsets = [0, 2], sizes = [6, 1], strides = [1, 1]} : vector<6x3xf32> to vector<6x1xf32>
    %c0_1 = arith.constant 0 : index
    %c0_2 = arith.constant 0 : index
    %4 = vector.load %arg3[%c0_1, %c0_2] : memref<6x32xf32, #tpu.memory_space<vmem>>, vector<6x32xf32>
    %c0_3 = arith.constant 0 : index
    %c0_4 = arith.constant 0 : index
    %c0_5 = arith.constant 0 : index
    %5 = vector.load %arg2[%c0_3, %c0_4, %c0_5] : memref<1x32x256xf32, #tpu.memory_space<vmem>>, vector<1x32x256xf32>
    %6 = vector.shape_cast %5 : vector<1x32x256xf32> to vector<32x256xf32>
    %cst = arith.constant dense<0.000000e+00> : vector<6x256xf32>
    %7 = tpu.matmul %4, %6, %cst {dimension_numbers = #tpu.dot_dimension_numbers<[1], [0], [0], [1], [0, 0, 1, 1], [], []>} : vector<6x32xf32>, vector<32x256xf32>, vector<6x256xf32> -> vector<6x256xf32>
    %8 = vector.broadcast %1 : vector<6x1xf32> to vector<6x256xf32>
    %9 = arith.addf %7, %8 : vector<6x256xf32>
    %10 = arith.negf %9 : vector<6x256xf32>
    %11 = math.exp %10 : vector<6x256xf32>
    %cst_6 = arith.constant 1.000000e+00 : f32
    %12 = vector.broadcast %cst_6 : f32 to vector<6x256xf32>
    %13 = arith.addf %12, %11 : vector<6x256xf32>
    %14 = arith.divf %12, %13 : vector<6x256xf32>
    %15 = vector.broadcast %2 : vector<6x1xf32> to vector<6x256xf32>
    %16 = arith.mulf %14, %15 : vector<6x256xf32>
    %17 = vector.broadcast %3 : vector<6x1xf32> to vector<6x256xf32>
    %18 = arith.addf %16, %17 : vector<6x256xf32>
    %19 = vector.extract_strided_slice %18 {offsets = [0, 0], sizes = [1, 256], strides = [1, 1]} : vector<6x256xf32> to vector<1x256xf32>
    %c0_7 = arith.constant 0 : index
    %c0_8 = arith.constant 0 : index
    %c0_9 = arith.constant 0 : index
    %20 = vector.load %arg5[%c0_7, %c0_8, %c0_9] : memref<1x1x256xf32, #tpu.memory_space<vmem>>, vector<1x1x256xf32>
    %21 = vector.shape_cast %20 : vector<1x1x256xf32> to vector<1x256xf32>
    %22 = vector.shape_cast %19 : vector<1x256xf32> to vector<1x1x256xf32>
    tpu.vector_store %arg5[%c0_7, %c0_8, %c0_9], %22 {strides = array<i32>} : memref<1x1x256xf32, #tpu.memory_space<vmem>>, vector<1x1x256xf32>,
    %23 = vector.extract_strided_slice %18 {offsets = [1, 0], sizes = [5, 256], strides = [1, 1]} : vector<6x256xf32> to vector<5x256xf32>
    %c0_10 = arith.constant 0 : index
    %c0_11 = arith.constant 0 : index
    %c0_12 = arith.constant 0 : index
    %24 = vector.load %arg6[%c0_10, %c0_11, %c0_12] : memref<1x5x256xf32, #tpu.memory_space<vmem>>, vector<1x5x256xf32>
    %25 = vector.shape_cast %24 : vector<1x5x256xf32> to vector<5x256xf32>
    %26 = vector.shape_cast %23 : vector<5x256xf32> to vector<1x5x256xf32>
    tpu.vector_store %arg6[%c0_10, %c0_11, %c0_12], %26 {strides = array<i32>} : memref<1x5x256xf32, #tpu.memory_space<vmem>>, vector<1x5x256xf32>,
    return
  }
  func.func @transform_0(%arg0: i32, %arg1: i32) -> (i32, i32, i32) {
    %c0_i32 = arith.constant 0 : i32
    %c0_i32_0 = arith.constant 0 : i32
    return %arg0, %c0_i32, %arg1 : i32, i32, i32
  }
  func.func @transform_1(%arg0: i32, %arg1: i32) -> (i32, i32) {
    %c0_i32 = arith.constant 0 : i32
    %c0_i32_0 = arith.constant 0 : i32
    %c0_i32_1 = arith.constant 0 : i32
    return %c0_i32, %c0_i32_0 : i32, i32
  }
  func.func @transform_2(%arg0: i32, %arg1: i32) -> (i32, i32) {
    %c0_i32 = arith.constant 0 : i32
    %c0_i32_0 = arith.constant 0 : i32
    %c0_i32_1 = arith.constant 0 : i32
    return %c0_i32, %c0_i32_0 : i32, i32
  }
  func.func @transform_3(%arg0: i32, %arg1: i32) -> (i32, i32, i32) {
    %c0_i32 = arith.constant 0 : i32
    %c0_i32_0 = arith.constant 0 : i32
    return %arg0, %c0_i32, %arg1 : i32, i32, i32
  }
  func.func @transform_4(%arg0: i32, %arg1: i32) -> (i32, i32, i32) {
    %c0_i32 = arith.constant 0 : i32
    %c0_i32_0 = arith.constant 0 : i32
    return %arg0, %c0_i32, %arg1 : i32, i32, i32
  }
}

</mosaic_0001>

<llo_original>
// kernel: tpu_custom_call.1
$region0: #{tpu_custom_call.1}
  #allocation0 [shape = 'u32[]', space=smem, size = 0x4, offset = 0x4, fixed_abs, tag = 'smem constant byte address 0x4 - core index']
  #allocation1 [shape = 'u32[144,128]{1,0:T(1,128)}', space=vmem, size = 0x12000, scoped, tag = 'internal scratch']
  %s0 = inlined_call_operand.hbm [shape: f32[2,32,256], index: 0, kind: input, shape index: {}]
  %s1 = inlined_call_operand.vmem [shape: f32[6,32], index: 1, kind: input, shape index: {}]
  %s2 = inlined_call_operand.vmem [shape: f32[6,3], index: 2, kind: input, shape index: {}]
  %s3 = inlined_call_operand.hbm [shape: f32[2,1,256], index: 3, kind: output, shape index: {0}]
  %s4 = inlined_call_operand.vmem [shape: f32[2,5,256], index: 4, kind: output, shape index: {1}]
  %5 = xla_tuple %s3, %s4
  %s6 = sld [smem:[#allocation0]]
  $region57: #{tpu_custom_call.1} parent=0
    _
  %s8 = ssub.s32 1, %s6
  %s9 = scalar_select 0, %s8, %s6
  $region1: #{tpu_custom_call.1} parent=0
    #allocation2 [shape = 'u8[65536]{0}', space=vmem, size = 0x10000, scoped, tag = 'input window, operand 0']
    #allocation3 [shape = 's32[2]{0}', space=sflag, size = 0x8, scoped, tag = 'scoped memory for tpu_custom_call.1']
    #allocation4 [shape = 's32[2]{0}', space=sflag, size = 0x8, scoped, tag = 'scoped memory for tpu_custom_call.1']
    #allocation5 [shape = 'u8[2048]{0}', space=vmem, size = 0x800, scoped, tag = 'output window, operand 0']
    %10 = vsyncpa [#allocation3], 0
    %s11 = scalar_lea.sflag [#allocation3], 1
    %12 = vsyncpa %s11, 0
    %13 = vsyncpa [#allocation4], 0
    %s14 = scalar_lea.sflag [#allocation4], 1
    %15 = vsyncpa %s14, 0
    loop: start=0, step=1, limit=4
    $region2: #{tpu_custom_call.1} parent=1 // loop_pre_header
      _
    $region3: #{tpu_custom_call.1} parent=1 // loop_header
      %s17 = sphi 0, %s21
      %p18 = scmp.ge.s32.totalorder %s17, 4
      %s24 = sphi 0, %s36
      %s25 = sphi 0, %s32
      %s26 = sphi 0, %s24
      %s27 = sphi 0, %s25
      %s28 = sphi 0, %s26
      %s29 = sphi 0, %s27
      %s41 = sphi 0, %s43
      %s44 = sphi 0, %s41
      %s45 = sphi 0, %s44
      %s61 = sphi 0, %s45
      %s65 = sphi 0, %s65
      %s67 = sphi 0, %s65
      %s68 = sphi 0, %s67
      %s82 = sphi 0, %s68
      %s86 = sphi 0, %s86
      %s88 = sphi 0, %s86
      %s89 = sphi 0, %s88
      %s103 = sphi 0, %s89
      %s111 = sphi 0, %s113
      %s114 = sphi 0, %s111
      %s115 = sphi 0, %s114
      %s131 = sphi 0, %s115
      %s139 = sphi 0, %s141
      %s142 = sphi 0, %s139
      %s143 = sphi 0, %s142
      %s159 = sphi 0, %s143
    $region4: #{tpu_custom_call.1} parent=1 // loop_header_branch
      %20 = sbr.rel (%p18) target = $region8
    $region5: #{tpu_custom_call.1} parent=1 // loop_body
      %s22 = ssub.s32 %s17, 1
      %s23 = ssub.s32 %s17, 2
      %s30 = sadd.s32 1, %s25
      %p31 = scmp.ge.s32.totalorder %s30, 1
      %s32 = scalar_select %p31, 0, %s30
      %s33 = sadd.s32 1, %s24
      %s34 = scalar_select %p31, %s33, %s24
      %p35 = scmp.ge.s32.totalorder %s34, 2
      %s36 = scalar_select %p35, 0, %s34
      %s37 = ssub.s32 %s24, %s36
      %s38 = ssub.s32 %s25, %s32
      %s39 = sor.u32 %s37, %s38
      %p40 = scmp.eq.s32.totalorder %s39, 0
      %s42 = sadd.s32 %s41, 1
      %s43 = scalar_select %p40, %s41, %s42
      %p46 = pneg %p40
      %p47 = scmp.eq.s32.totalorder %s17, 1
      %p48 = por %p46, %p47
      %p49 = scmp.ne.s32.totalorder %s41, %s44
      %p50 = scmp.eq.s32.totalorder %s17, 0
      %p51 = por %p49, %p50
      %p52 = scmp.ne.s32.totalorder %s41, %s44
      %p53 = scmp.eq.s32.totalorder %s22, 1
      %p54 = por %p52, %p53
      %p55 = scmp.ne.s32.totalorder %s44, %s45
      %p56 = scmp.eq.s32.totalorder %s22, 0
      %p57 = por %p55, %p56
      %p58 = scmp.ne.s32.totalorder %s44, %s45
      %p59 = scmp.eq.s32.totalorder %s23, 1
      %p60 = por %p58, %p59
      %p62 = scmp.ne.s32.totalorder %s45, %s61
      %p63 = scmp.eq.s32.totalorder %s23, 0
      %p64 = por %p62, %p63
      %s66 = sadd.s32 %s65, 1
      %p69 = scmp.eq.s32.totalorder %s17, 1
      %p70 = scmp.ne.s32.totalorder %s65, %s67
      %p71 = scmp.eq.s32.totalorder %s17, 0
      %p72 = por %p70, %p71
      %p73 = scmp.ne.s32.totalorder %s65, %s67
      %p74 = scmp.eq.s32.totalorder %s22, 1
      %p75 = por %p73, %p74
      %p76 = scmp.ne.s32.totalorder %s67, %s68
      %p77 = scmp.eq.s32.totalorder %s22, 0
      %p78 = por %p76, %p77
      %p79 = scmp.ne.s32.totalorder %s67, %s68
      %p80 = scmp.eq.s32.totalorder %s23, 1
      %p81 = por %p79, %p80
      %p83 = scmp.ne.s32.totalorder %s68, %s82
      %p84 = scmp.eq.s32.totalorder %s23, 0
      %p85 = por %p83, %p84
      %s87 = sadd.s32 %s86, 1
      %p90 = scmp.eq.s32.totalorder %s17, 1
      %p91 = scmp.ne.s32.totalorder %s86, %s88
      %p92 = scmp.eq.s32.totalorder %s17, 0
      %p93 = por %p91, %p92
      %p94 = scmp.ne.s32.totalorder %s86, %s88
      %p95 = scmp.eq.s32.totalorder %s22, 1
      %p96 = por %p94, %p95
      %p97 = scmp.ne.s32.totalorder %s88, %s89
      %p98 = scmp.eq.s32.totalorder %s22, 0
      %p99 = por %p97, %p98
      %p100 = scmp.ne.s32.totalorder %s88, %s89
      %p101 = scmp.eq.s32.totalorder %s23, 1
      %p102 = por %p100, %p101
      %p104 = scmp.ne.s32.totalorder %s89, %s103
      %p105 = scmp.eq.s32.totalorder %s23, 0
      %p106 = por %p104, %p105
      %s107 = ssub.s32 %s24, %s36
      %s108 = ssub.s32 %s25, %s32
      %s109 = sor.u32 %s107, %s108
      %p110 = scmp.eq.s32.totalorder %s109, 0
      %s112 = sadd.s32 %s111, 1
      %s113 = scalar_select %p110, %s111, %s112
      %p116 = pneg %p110
      %p117 = scmp.eq.s32.totalorder %s17, 1
      %p118 = por %p116, %p117
      %p119 = scmp.ne.s32.totalorder %s111, %s114
      %p120 = scmp.eq.s32.totalorder %s17, 0
      %p121 = por %p119, %p120
      %p122 = scmp.ne.s32.totalorder %s111, %s114
      %p123 = scmp.eq.s32.totalorder %s22, 1
      %p124 = por %p122, %p123
      %p125 = scmp.ne.s32.totalorder %s114, %s115
      %p126 = scmp.eq.s32.totalorder %s22, 0
      %p127 = por %p125, %p126
      %p128 = scmp.ne.s32.totalorder %s114, %s115
      %p129 = scmp.eq.s32.totalorder %s23, 1
      %p130 = por %p128, %p129
      %p132 = scmp.ne.s32.totalorder %s115, %s131
      %p133 = scmp.eq.s32.totalorder %s23, 0
      %p134 = por %p132, %p133
      %s135 = ssub.s32 %s24, %s36
      %s136 = ssub.s32 %s25, %s32
      %s137 = sor.u32 %s135, %s136
      %p138 = scmp.eq.s32.totalorder %s137, 0
      %s140 = sadd.s32 %s139, 1
      %s141 = scalar_select %p138, %s139, %s140
      %p144 = pneg %p138
      %p145 = scmp.eq.s32.totalorder %s17, 1
      %p146 = por %p144, %p145
      %p147 = scmp.ne.s32.totalorder %s139, %s142
      %p148 = scmp.eq.s32.totalorder %s17, 0
      %p149 = por %p147, %p148
      %p150 = scmp.ne.s32.totalorder %s139, %s142
      %p151 = scmp.eq.s32.totalorder %s22, 1
      %p152 = por %p150, %p151
      %p153 = scmp.ne.s32.totalorder %s142, %s143
      %p154 = scmp.eq.s32.totalorder %s22, 0
      %p155 = por %p153, %p154
      %p156 = scmp.ne.s32.totalorder %s142, %s143
      %p157 = scmp.eq.s32.totalorder %s23, 1
      %p158 = por %p156, %p157
      %p160 = scmp.ne.s32.totalorder %s143, %s159
      %p161 = scmp.eq.s32.totalorder %s23, 0
      %p162 = por %p160, %p161
      %p163 = scmp.le.s32.totalorder 1, %s17
      %p164 = scmp.lt.s32.totalorder %s17, 3
      %p165 = pnand %p163, %p164
      %p166 = pneg %p165
      // Predicated region
      $region9: #{tpu_custom_call.1} parent=5 // pred_check
        _
      $region10: #{tpu_custom_call.1} parent=5 // pred_check_branch
        %168 = sbr.rel (%p165) target = $region12
      $region11: #{tpu_custom_call.1} parent=5 // pred_region
        %s169 = ssub.s32 %s17, 1
        // Predicated region
        $region13: #{tpu_custom_call.1} parent=11 // pred_check
          %p170 = pneg %p78
        $region14: #{tpu_custom_call.1} parent=11 // pred_check_branch
          %172 = sbr.rel (%p170) target = $region16
        $region15: #{tpu_custom_call.1} parent=11 // pred_region
          _
        $region16: #{tpu_custom_call.1} parent=11 // pred_fallthru
          _
        // Predicated region
        $region17: #{tpu_custom_call.1} parent=11 // pred_check
          %p173 = pneg %p99
        $region18: #{tpu_custom_call.1} parent=11 // pred_check_branch
          %175 = sbr.rel (%p173) target = $region20
        $region19: #{tpu_custom_call.1} parent=11 // pred_region
          _
        $region20: #{tpu_custom_call.1} parent=11 // pred_fallthru
          _
      $region12: #{tpu_custom_call.1} parent=5 // pred_fallthru
        _
      %p176 = scmp.lt.s32.totalorder %s17, 2
      // Predicated region
      $region21: #{tpu_custom_call.1} parent=5 // pred_check
        %p177 = pneg %p176
      $region22: #{tpu_custom_call.1} parent=5 // pred_check_branch
        %179 = sbr.rel (%p177) target = $region24
      $region23: #{tpu_custom_call.1} parent=5 // pred_region
        // Predicated region
        $region25: #{tpu_custom_call.1} parent=23 // pred_check
          %p180 = pneg %p51
        $region26: #{tpu_custom_call.1} parent=23 // pred_check_branch
          %182 = sbr.rel (%p180) target = $region28
        $region27: #{tpu_custom_call.1} parent=23 // pred_region
          %s183 = sand.u32 %s41, 1
          %s184 = scalar_lea.sflag [#allocation3], %s183
          %s185 = sand.u32 %s41, 1
          %s186 = smul.addr %s185, 64
          %s187 = scalar_lea.vmem [#allocation2], %s186
          %s188 = smul.u32 2, %s25
          %s190 = ssub.s32 1024, 1024
          %191 = vsyncadd %s184, %s190
          %s192 = smul.addr %s24, 8
          %s193 = sadd.s32 %s188, %s192
          %s194 = smul.addr %s193, 128
          %s195 = scalar_lea.hbm %s0, %s194
          %s196 = sshll.u32 %s187, 4
          %s197 = int_to_ptr.vmem [resolvable:$true] %s196
          %202 = dma.hbm_to_vmem [thread:$0]  %s195, 1024, %s197, %s184, 256, 256, 16
        $region28: #{tpu_custom_call.1} parent=23 // pred_fallthru
          _
      $region24: #{tpu_custom_call.1} parent=5 // pred_fallthru
        _
      %p203 = scmp.le.s32.totalorder 1, %s17
      %p204 = scmp.lt.s32.totalorder %s17, 3
      %p205 = pnand %p203, %p204
      %p206 = pneg %p205
      // Predicated region
      $region29: #{tpu_custom_call.1} parent=5 // pred_check
        _
      $region30: #{tpu_custom_call.1} parent=5 // pred_check_branch
        %208 = sbr.rel (%p205) target = $region32
      $region31: #{tpu_custom_call.1} parent=5 // pred_region
        %s209 = ssub.s32 %s17, 1
        %s210 = sand.u32 %s44, 1
        %s211 = scalar_lea.sflag [#allocation3], %s210
        %s212 = sand.u32 %s44, 1
        %s213 = smul.addr %s212, 64
        %s214 = scalar_lea.vmem [#allocation2], %s213
        // Predicated region
        $region33: #{tpu_custom_call.1} parent=31 // pred_check
          %p215 = pneg %p57
        $region34: #{tpu_custom_call.1} parent=31 // pred_check_branch
          %217 = sbr.rel (%p215) target = $region36
        $region35: #{tpu_custom_call.1} parent=31 // pred_region
          %218 = dma.done %s211, 1024
        $region36: #{tpu_custom_call.1} parent=31 // pred_fallthru
          _
        %s219 = sand.u32 %s44, 1
        %s220 = scalar_lea.sflag [#allocation3], %s219
        %s221 = sand.u32 %s44, 1
        %s222 = smul.addr %s221, 64
        %s223 = scalar_lea.vmem [#allocation2], %s222
        %p224 = pneg %p57
        %p225 = pneg %p54
        %p226 = pneg %p78
        %p227 = pneg %p75
        %p228 = pneg %p99
        %p229 = pneg %p96
        %p230 = pneg %p127
        %p231 = pneg %p124
        %s232 = sand.u32 %s114, 1
        %s233 = scalar_lea.sflag [#allocation4], %s232
        %s234 = sand.u32 %s114, 1
        %s235 = smul.addr %s234, 2
        %s236 = scalar_lea.vmem [#allocation5], %s235
        %p237 = pneg %p155
        %p238 = pneg %p152
        %s239 = smul.u32 2, %s27
        %p240 = scmp.lt.s32.totalorder %s26, 1
        %s241 = scalar_select %p240, %s26, 1
        %p242 = scmp.lt.s32.totalorder %s239, 1
        %s243 = scalar_select %p242, %s239, 1
        %s244 = smul.addr %s241, 2
        %s245 = sadd.s32 %s243, %s244
        %s246 = smul.addr %s245, 8
        %s247 = scalar_lea.vmem %s4, %s246
        %s248 = smul.u32 2, %s27
        %s249 = smul.u32 2, %s27
        %s250 = smul.u32 2, %s27
        %p251 = scmp.lt.s32.totalorder %s26, 1
        %s252 = scalar_select %p251, %s26, 1
        %p253 = scmp.lt.s32.totalorder %s250, 1
        %s254 = scalar_select %p253, %s250, 1
        %s255 = smul.addr %s252, 2
        %s256 = sadd.s32 %s254, %s255
        %s257 = smul.addr %s256, 8
        %s258 = scalar_lea.vmem %s4, %s257
        %s259 = smul.u32 2, %s27
        %v260 = vld [vmem:[%s2] sm:$0x3f]
        %v261 = vld [vmem:[%s1] sm:$0x3f]
        %v262 = vld [vmem:[%s214] sm:$0xff]
        %v263 = vld [vmem:[%s214 + $0x8] sm:$0xff]
        %v264 = vld [vmem:[%s214 + $0x10] sm:$0xff]
        %v265 = vld [vmem:[%s214 + $0x18] sm:$0xff]
        %v266 = vld [vmem:[%s214 + $0x20] sm:$0xff]
        %v267 = vld [vmem:[%s214 + $0x28] sm:$0xff]
        %v268 = vld [vmem:[%s214 + $0x30] sm:$0xff]
        %v269 = vld [vmem:[%s214 + $0x38] sm:$0xff]
        %271 = vset.pattern.permute.xlu0 0
        %272 = vperm.xlu0 %271, %v260
        %v273 = vpop.permute.xlu0 %272
        %vm275 = vcmask 261120
        %v277 = vsel %vm275, %v261, 0
        %279 = vmatprep.subr.mxu0 0.0
        %280 = vmatpush1.msra.mxu0 0.0
        %281 = vmatprep.subr.mxu0 0.0
        %282 = vmatpush1.msra.mxu0 0.0
        %283 = vmatprep.subr.mxu0 0.0
        %284 = vmatpush1.msra.mxu0 0.0
        %285 = vmatprep.subr.mxu0 0.0
        %286 = vmatpush1.msra.mxu0 0.0
        %287 = vmatprep.subr.mxu0 0.0
        %288 = vmatpush1.msra.mxu0 0.0
        %289 = vmatprep.subr.mxu0 0.0
        %290 = vmatpush1.msra.mxu0 0.0
        %291 = vmatprep.subr.mxu0 0.0
        %292 = vmatpush1.msra.mxu0 0.0
        %293 = vmatprep.subr.mxu0 0.0
        %294 = vmatpush1.msra.mxu0 0.0
        %295 = vmatprep.subr.mxu0 0.0
        %296 = vmatpush1.msra.mxu0 0.0
        %297 = vmatprep.subr.mxu0 0.0
        %298 = vmatpush1.msra.mxu0 0.0
        %299 = vmatprep.subr.mxu0 0.0
        %300 = vmatpush1.msra.mxu0 0.0
        %301 = vmatprep.subr.mxu0 0.0
        %302 = vmatpush1.msra.mxu0 0.0
        %303 = vmatprep.subr.mxu0 %v269
        %304 = vmatpush1.msra.mxu0 %v268
        %305 = vmatprep.subr.mxu0 %v267
        %306 = vmatpush1.msra.mxu0 %v266
        %307 = vmatprep.subr.mxu0 %v265
        %308 = vmatpush1.msra.mxu0 %v264
        %309 = vmatprep.subr.mxu0 %v263
        %310 = vmatpush1.msra.mxu0 %v262
        %311 = vmatprep.subr.mxu0 0.0
        %312 = vmatpush2.msra.mxu0 0.0
        %313 = vmatprep.subr.mxu0 0.0
        %314 = vmatpush2.msra.mxu0 0.0
        %315 = vmatprep.subr.mxu0 0.0
        %316 = vmatpush2.msra.mxu0 0.0
        %317 = vmatprep.subr.mxu0 0.0
        %318 = vmatpush2.msra.mxu0 0.0
        %319 = vmatprep.subr.mxu0 0.0
        %320 = vmatpush2.msra.mxu0 0.0
        %321 = vmatprep.subr.mxu0 0.0
        %322 = vmatpush2.msra.mxu0 0.0
        %323 = vmatprep.subr.mxu0 0.0
        %324 = vmatpush2.msra.mxu0 0.0
        %325 = vmatprep.subr.mxu0 0.0
        %326 = vmatpush2.msra.mxu0 0.0
        %327 = vmatprep.subr.mxu0 0.0
        %328 = vmatpush2.msra.mxu0 0.0
        %329 = vmatprep.subr.mxu0 0.0
        %330 = vmatpush2.msra.mxu0 0.0
        %331 = vmatprep.subr.mxu0 0.0
        %332 = vmatpush2.msra.mxu0 0.0
        %333 = vmatprep.subr.mxu0 0.0
        %334 = vmatpush2.msra.mxu0 0.0
        %335 = vmatprep.subr.mxu0 0.0
        %336 = vmatpush2.msra.mxu0 0.0
        %337 = vmatprep.subr.mxu0 0.0
        %338 = vmatpush2.msra.mxu0 0.0
        %339 = vmatprep.subr.mxu0 0.0
        %340 = vmatpush2.msra.mxu0 0.0
        %341 = vmatprep.subr.mxu0 0.0
        %342 = vmatpush2.msra.mxu0 0.0
        %343 = vmatprep.mubr.f32.mxu0 0.0
        %344 = vmatmul.mubr.f32.gmra.mxu0 %v277
        %v345 = vpop.f32.mrf.mxu0
        %v346 = vadd.f32 %v273, %v345
        %v347 = vpop.f32.mrf.mxu0
        %v348 = vadd.f32 %v273, %v347
        %349 = vdwg.mxu0
        %v350 = vxor.u32 %v346, 2147483648
        %v351 = vxor.u32 %v348, 2147483648
        %v352 = vmul.f32 %v350, 1.442695
        %v353 = vpow.pop %v352
        %v354 = vmul.f32 %v351, 1.442695
        %v355 = vpow.pop %v354
        %v356 = vadd.f32 %v353, 1.0
        %v357 = vadd.f32 %v355, 1.0
        %v358 = vrcp.pop %v356
        %v359 = vmul.f32 1.0, %v358
        %v360 = vrcp.pop %v357
        %v361 = vmul.f32 1.0, %v360
        %362 = vset.pattern.permute.xlu0 1
        %363 = vperm.xlu0 %362, %v260
        %v364 = vpop.permute.xlu0 %363
        %v366 = vmul.f32 %v359, %v364
        %v367 = vmul.f32 %v361, %v364
        %368 = vset.pattern.permute.xlu0 2
        %369 = vperm.xlu0 %368, %v260
        %v370 = vpop.permute.xlu0 %369
        %v372 = vadd.f32 %v366, %v370
        %v373 = vadd.f32 %v367, %v370
        %v376 = vcombine.low %v372, %v373
        %v378 = vunpack.c.l.s4 1966171168
        %v379 = vunpack.c.0.s8 %v378
        %v380 = vlaneseq
        %v381 = vshrl.u32 %v380, 7
        %v382 = vsub.s32 %v379, %v381
        %v383 = vrot.slane %v376, %v382
        %v385 = vunpack.c.l.s4 1966171168
        %v386 = vunpack.c.0.s8 %v385
        %v387 = vlaneseq
        %v388 = vshrl.u32 %v387, 7
        %v389 = vsub.s32 %v386, %v388
        %v390 = vrot.slane %v383, %v389
        %v392 = vlaneseq
        %vm393 = vcmp.ge.s32.totalorder %v392, 0
        %vm394 = vcmp.lt.s32.totalorder %v392, 256
        %vm395 = vmand %vm393, %vm394
        %396 = vst.msk [vmem:[%s236] sm:$0x3] %vm395, %v390
        %v397 = vrot.slane %v372, 1
        %v398 = vrot.slane %v373, 1
        %401 = vst [vmem:[%s258] sm:$0x1f] %v397
        %402 = vst [vmem:[%s258 + $0x8] sm:$0x1f] %v398
        %s403 = sand.u32 %s114, 1
        %s404 = scalar_lea.sflag [#allocation4], %s403
        %s405 = sand.u32 %s114, 1
        %s406 = smul.addr %s405, 2
        %s407 = scalar_lea.vmem [#allocation5], %s406
        %s408 = smul.u32 2, %s27
        %p409 = scmp.lt.s32.totalorder %s26, 1
        %s410 = scalar_select %p409, %s26, 1
        %p411 = scmp.lt.s32.totalorder %s408, 1
        %s412 = scalar_select %p411, %s408, 1
        %s413 = smul.addr %s410, 2
        %s414 = sadd.s32 %s412, %s413
        %s415 = smul.addr %s414, 8
        %s416 = scalar_lea.vmem %s4, %s415
        // Predicated region
        $region37: #{tpu_custom_call.1} parent=31 // pred_check
          %p417 = pneg %p124
        $region38: #{tpu_custom_call.1} parent=31 // pred_check_branch
          %419 = sbr.rel (%p417) target = $region40
        $region39: #{tpu_custom_call.1} parent=31 // pred_region
          %s420 = smul.u32 2, %s27
          %s422 = ssub.s32 32, 32
          %423 = vsyncadd %s404, %s422
          %s424 = smul.addr %s26, 2
          %s425 = sadd.s32 %s420, %s424
          %s426 = smul.addr %s425, 16
          %s427 = scalar_lea.hbm %s3, %s426
          %s429 = sshll.u32 %s407, 4
          %s430 = int_to_ptr.vmem [resolvable:$true] %s429
          %432 = dma.vmem_to_hbm [thread:$0]  %s430, 32, %s427, %s404
        $region40: #{tpu_custom_call.1} parent=31 // pred_fallthru
          _
        // Predicated region
        $region41: #{tpu_custom_call.1} parent=31 // pred_check
          %p433 = pneg %p152
        $region42: #{tpu_custom_call.1} parent=31 // pred_check_branch
          %435 = sbr.rel (%p433) target = $region44
        $region43: #{tpu_custom_call.1} parent=31 // pred_region
          %s436 = smul.u32 2, %s27
        $region44: #{tpu_custom_call.1} parent=31 // pred_fallthru
          _
      $region32: #{tpu_custom_call.1} parent=5 // pred_fallthru
        _
      %p437 = scmp.le.s32.totalorder 2, %s17
      // Predicated region
      $region45: #{tpu_custom_call.1} parent=5 // pred_check
        %p438 = pneg %p437
      $region46: #{tpu_custom_call.1} parent=5 // pred_check_branch
        %440 = sbr.rel (%p438) target = $region48
      $region47: #{tpu_custom_call.1} parent=5 // pred_region
        %s441 = ssub.s32 %s17, 2
        // Predicated region
        $region49: #{tpu_custom_call.1} parent=47 // pred_check
          %p442 = pneg %p130
        $region50: #{tpu_custom_call.1} parent=47 // pred_check_branch
          %444 = sbr.rel (%p442) target = $region52
        $region51: #{tpu_custom_call.1} parent=47 // pred_region
          %s445 = sand.u32 %s115, 1
          %s446 = scalar_lea.sflag [#allocation4], %s445
          %s447 = sand.u32 %s115, 1
          %s448 = smul.addr %s447, 2
          %s449 = scalar_lea.vmem [#allocation5], %s448
          %450 = dma.done %s446, 32
        $region52: #{tpu_custom_call.1} parent=47 // pred_fallthru
          _
        // Predicated region
        $region53: #{tpu_custom_call.1} parent=47 // pred_check
          %p451 = pneg %p158
        $region54: #{tpu_custom_call.1} parent=47 // pred_check_branch
          %453 = sbr.rel (%p451) target = $region56
        $region55: #{tpu_custom_call.1} parent=47 // pred_region
          %s454 = smul.u32 2, %s29
          %p455 = scmp.lt.s32.totalorder %s28, 1
          %s456 = scalar_select %p455, %s28, 1
          %p457 = scmp.lt.s32.totalorder %s454, 1
          %s458 = scalar_select %p457, %s454, 1
          %s459 = smul.addr %s456, 2
          %s460 = sadd.s32 %s458, %s459
          %s461 = smul.addr %s460, 8
          %s462 = scalar_lea.vmem %s4, %s461
        $region56: #{tpu_custom_call.1} parent=47 // pred_fallthru
          _
      $region48: #{tpu_custom_call.1} parent=5 // pred_fallthru
        _
    $region6: #{tpu_custom_call.1} parent=1 // loop_footer
      %s21 = sadd.s32 1, %s17
    $region7: #{tpu_custom_call.1} parent=1 // loop_footer_branch
      %16 = sbr.rel target = $region3
    $region8: #{tpu_custom_call.1} parent=1 // loop_exit
      _
    %463 = vsyncpa [#allocation3], 1
    %s464 = scalar_lea.sflag [#allocation3], 1
    %465 = vsyncpa %s464, 1
    %466 = vsyncpa [#allocation4], 1
    %s467 = scalar_lea.sflag [#allocation4], 1
    %468 = vsyncpa %s467, 1

</llo_original>
